<compile_context>
chip_gen: v6e
topology: v6e:2x2x1
jax: 0.10.0
libtpu: 0.0.40
codegen_flags: <defaults>
</compile_context>

<pallas_src>
import jax
import jax.numpy as jnp
from jax.experimental import pallas as pl
from jax.experimental.pallas import tpu as pltpu


_LN_EPS = 1e-5  # nn.LayerNorm default


# ----------------------------------------------------------------------------
# Optional materializing identity copy (tiled, independent output buffer).
# NOT used by forward() — kept only for callers that need a real copy.
# ----------------------------------------------------------------------------
def _copy_kernel(x_ref, o_ref):
    o_ref[...] = x_ref[...]


def identity_copy_pallas(x, row_tile_target=256, col_tile_target=8192):
    """Tiled identity copy of an NCHW tensor into a fresh buffer."""
    B, C, H, W = x.shape
    rows, cols = B * C, H * W
    x2 = x.reshape(rows, cols)
    itemsize = jnp.dtype(x.dtype).itemsize

    rt = rows if rows < 8 else max(8, (min(row_tile_target, rows) // 8) * 8)
    ct = cols if cols < 128 else max(128, (min(col_tile_target, cols) // 128) * 128)
    grid = (pl.cdiv(rows, rt), pl.cdiv(cols, ct))

    blk_bytes = rt * ct * itemsize
    vmem_limit = int(min(40 << 20, max(8 << 20, 4 * blk_bytes + (2 << 20))))

    out = pl.pallas_call(
        _copy_kernel,
        out_shape=jax.ShapeDtypeStruct((rows, cols), x.dtype),
        grid=grid,
        in_specs=[pl.BlockSpec((rt, ct), lambda i, j: (i, j))],
        out_specs=pl.BlockSpec((rt, ct), lambda i, j: (i, j)),
        compiler_params=pltpu.CompilerParams(
            dimension_semantics=("parallel", "parallel"),
            vmem_limit_bytes=vmem_limit,
        ),
        cost_estimate=pl.CostEstimate(
            flops=0, transcendentals=0,
            bytes_accessed=2 * rows * cols * itemsize),
    )(x2)
    return out.reshape(B, C, H, W)


# ----------------------------------------------------------------------------
# LayerNorm2d: per-pixel LayerNorm over the channel dim of an NCHW tensor.
# (Constructed by SS2DBlock.__init__; not called by its forward(). Implemented
# as the module's real compute path.)
# ----------------------------------------------------------------------------
def _layernorm2d_kernel(x_ref, g_ref, b_ref, o_ref):
    # x_ref block: (1, C, hw_tile).  Channels on sublanes, H*W on lanes.
    x = x_ref[0].astype(jnp.float32)                         # (C, hw_tile)
    c = x.shape[0]
    inv_c = jnp.float32(1.0 / c)
    # Fused single-pass statistics: two independent XLU reductions over the
    # same x vregs, no serial mean -> (x - mean) -> var dependency.
    s1 = jnp.sum(x, axis=0, keepdims=True)                   # (1, hw_tile)
    s2 = jnp.sum(x * x, axis=0, keepdims=True)               # (1, hw_tile)
    mean = s1 * inv_c
    var = s2 * inv_c - mean * mean                           # E[x^2] - mean^2
    inv = jax.lax.rsqrt(var + _LN_EPS)
    y = (x - mean) * inv * g_ref[...] + b_ref[...]           # (C,1) broadcast
    o_ref[0] = y.astype(o_ref.dtype)
    # NOTE: for a partial last HW tile the padded lanes may hold NaN/Inf; the
    # BlockSpec writeback clips them, so never switch to manual unmasked stores.


def _layernorm2d_jnp(x, gamma, beta):
    """Plain-jnp fallback for tiny tensors / C < 8 (launch overhead dominates)."""
    xf = x.astype(jnp.float32)
    mean = jnp.mean(xf, axis=1, keepdims=True)
    var = jnp.mean((xf - mean) ** 2, axis=1, keepdims=True)
    y = (xf - mean) * jax.lax.rsqrt(var + _LN_EPS)
    y = (y * gamma.astype(jnp.float32)[None, :, None, None]
         + beta.astype(jnp.float32)[None, :, None, None])
    return y.astype(x.dtype)


def _lane_tile(hw, c, itemsize, target_bytes=6 * 1024 * 1024):
    """Pick an H*W lane tile: multiple of 128, ~target_bytes per input block."""
    if hw <= 128:
        return hw                      # full-dim block is always legal
    t = max(128, target_bytes // max(1, c * itemsize))
    t = min(t, hw)
    return max(128, (t // 128) * 128)  # cdiv grid handles the partial last block


def layernorm2d_pallas(x, gamma, beta, *, force_pallas=False):
    """LayerNorm over C for each (b, h, w) of an NCHW tensor — no host transposes."""
    B, C, H, W = x.shape
    HW = H * W
    itemsize = jnp.dtype(x.dtype).itemsize
    total_bytes = B * C * HW * itemsize

    # Small-tensor / narrow-channel fast path: kernel launch + pipeline
    # prologue dwarfs the work, and C < 8 wastes most of every vreg's sublanes.
    if not force_pallas and (total_bytes < (1 << 20) or C < 8):
        return _layernorm2d_jnp(x, gamma, beta)

    x3 = x.reshape(B, C, HW)
    g = gamma.reshape(C, 1).astype(jnp.float32)
    b = beta.reshape(C, 1).astype(jnp.float32)

    hw_tile = _lane_tile(HW, C, itemsize)
    # Guarantee >=2 grid steps so v7x's two TensorCores both get work
    # (harmless on single-TC v5e/v6e).
    while (B * pl.cdiv(HW, hw_tile) < 2 and hw_tile >= 256
           and hw_tile % 128 == 0):
        hw_tile = max(128, ((hw_tile // 2) // 128) * 128)
    grid = (B, pl.cdiv(HW, hw_tile))

    # Right-size VMEM: in+out blocks double-buffered, plus f32 temporaries
    # inside the kernel, plus headroom for Mosaic scratch.  Cap at 40 MiB so
    # it comfortably fits v7x's 64 MiB-per-TC VMEM.
    blk_io = C * hw_tile * itemsize
    need = 4 * blk_io + 2 * C * hw_tile * 4 + (2 << 20)
    vmem_limit = int(min(40 << 20, max(8 << 20, need)))

    n_elems = B * C * HW
    cost = pl.CostEstimate(
        flops=8 * n_elems,
        transcendentals=B * HW,                     # rsqrt per pixel
        bytes_accessed=2 * n_elems * itemsize + 2 * C * 4,
    )

    out = pl.pallas_call(
        _layernorm2d_kernel,
        out_shape=jax.ShapeDtypeStruct((B, C, HW), x.dtype),
        grid=grid,
        in_specs=[
            pl.BlockSpec((1, C, hw_tile), lambda bi, j: (bi, 0, j)),
            pl.BlockSpec((C, 1), lambda bi, j: (0, 0)),
            pl.BlockSpec((C, 1), lambda bi, j: (0, 0)),
        ],
        out_specs=pl.BlockSpec((1, C, hw_tile), lambda bi, j: (bi, 0, j)),
        compiler_params=pltpu.CompilerParams(
            dimension_semantics=("parallel", "parallel"),
            vmem_limit_bytes=vmem_limit,
        ),
        cost_estimate=cost,
    )(x3, g, b)
    return out.reshape(B, C, H, W)


# ----------------------------------------------------------------------------
# SS2DBlock wrapper (forward semantics identical to the PyTorch reference).
# ----------------------------------------------------------------------------
class SS2DBlockPallas:
    def __init__(self, dim, d_state=16, ssm_ratio=2.0, channel_first=True):
        # TODO(synk): models.mamba.vmamba.SS2D is not importable in the reference,
        # so its __init__ falls back to nn.Identity(); there are no selective-scan
        # weights to port.
        self.dim = dim
        # LayerNorm2d params (nn.LayerNorm default init: weight=1, bias=0).
        self.norm_gamma = jnp.ones((dim,), jnp.float32)
        self.norm_beta = jnp.zeros((dim,), jnp.float32)

    def __call__(self, x):
        # Reference forward: return self.ss2d(x) == Identity(x); self.norm unused.
        # Zero-copy pass-through (no pallas_call, zero HBM traffic).
        return x

    def apply_norm(self, x):
        # Helper exposing the module's LayerNorm2d (not part of forward()).
        return layernorm2d_pallas(x, self.norm_gamma, self.norm_beta)


# ----------------------------------------------------------------------------
def _ln_ref(x, gamma, beta):
    mean = jnp.mean(x, axis=1, keepdims=True)
    var = jnp.mean((x - mean) ** 2, axis=1, keepdims=True)
    y = (x - mean) * jax.lax.rsqrt(var + _LN_EPS)
    return y * gamma[None, :, None, None] + beta[None, :, None, None]


if __name__ == "__main__":
    key = jax.random.PRNGKey(0)
    kx, kg, kb, kx2, kg2, kb2 = jax.random.split(key, 6)

    # ---- module-consistent small shape (forward path) ----
    B, C, H, W = 2, 4, 16, 16
    x = jax.random.normal(kx, (B, C, H, W), dtype=jnp.float32)
    block = SS2DBlockPallas(dim=C)

    # 1) Forward pass: exact reference semantics (identity, zero HBM traffic).
    y = jax.block_until_ready(block(x))
    assert y.shape == x.shape and y.dtype == x.dtype
    assert jnp.array_equal(y, x), "identity forward mismatch"

    # 2) Materializing identity copy kernel (independent output buffer).
    yc = jax.block_until_ready(identity_copy_pallas(x))
    assert jnp.array_equal(yc, x), "identity copy kernel mismatch"

    # 3) LayerNorm2d small-tensor fast path (C=4 < 8 -> plain jnp).
    gamma = jax.random.normal(kg, (C,), jnp.float32)
    beta = jax.random.normal(kb, (C,), jnp.float32)
    yn = jax.block_until_ready(layernorm2d_pallas(x, gamma, beta))
    ref = _ln_ref(x, gamma, beta)
    assert jnp.allclose(yn, ref, atol=1e-4, rtol=1e-4), "layernorm2d (fast path) mismatch"

    # 4) LayerNorm2d Pallas kernel path (C multiple of 8, forced) vs reference.
    B2, C2, H2, W2 = 2, 32, 32, 32
    x2 = jax.random.normal(kx2, (B2, C2, H2, W2), dtype=jnp.float32)
    gamma2 = jax.random.normal(kg2, (C2,), jnp.float32)
    beta2 = jax.random.normal(kb2, (C2,), jnp.float32)
    yn2 = jax.block_until_ready(
        layernorm2d_pallas(x2, gamma2, beta2, force_pallas=True))
    ref2 = _ln_ref(x2, gamma2, beta2)
    assert jnp.allclose(yn2, ref2, atol=1e-4, rtol=1e-4), "layernorm2d (pallas) mismatch"

    # 5) Block-owned norm (weight=1, bias=0).
    yn3 = jax.block_until_ready(block.apply_norm(x))
    ref3 = _ln_ref(x, jnp.ones((C,), jnp.float32), jnp.zeros((C,), jnp.float32))
    assert jnp.allclose(yn3, ref3, atol=1e-4, rtol=1e-4), "block norm mismatch"

    print("KERNEL_OK")
</pallas_src>

<mosaic_0001>
module attributes {stable_mosaic.version = 11 : i64} {
  func.func @_copy_kernel(%arg0: i32, %arg1: i32, %arg2: memref<8x256xf32, #tpu.memory_space<vmem>>, %arg3: memref<8x256xf32, #tpu.memory_space<vmem>>) attributes {dimension_semantics = [#tpu.dimension_semantics<parallel>, #tpu.dimension_semantics<parallel>], iteration_bounds = array<i64: 1, 1>, scalar_prefetch = 0 : i64, scratch_operands = 0 : i64, tpu.core_type = #tpu.core_type<tc>, window_params = [{transform_indices = @transform_0, window_bounds = array<i64: 8, 256>}, {transform_indices = @transform_1, window_bounds = array<i64: 8, 256>}]} {
    %c0 = arith.constant 0 : index
    %c0_0 = arith.constant 0 : index
    %0 = vector.load %arg2[%c0, %c0_0] : memref<8x256xf32, #tpu.memory_space<vmem>>, vector<8x256xf32>
    %c0_1 = arith.constant 0 : index
    %c0_2 = arith.constant 0 : index
    %1 = vector.load %arg3[%c0_1, %c0_2] : memref<8x256xf32, #tpu.memory_space<vmem>>, vector<8x256xf32>
    tpu.vector_store %arg3[%c0_1, %c0_2], %0 {strides = array<i32>} : memref<8x256xf32, #tpu.memory_space<vmem>>, vector<8x256xf32>,
    return
  }
  func.func @transform_0(%arg0: i32, %arg1: i32) -> (i32, i32) {
    %c0_i32 = arith.constant 0 : i32
    return %arg0, %arg1 : i32, i32
  }
  func.func @transform_1(%arg0: i32, %arg1: i32) -> (i32, i32) {
    %c0_i32 = arith.constant 0 : i32
    return %arg0, %arg1 : i32, i32
  }
}

</mosaic_0001>

<llo_original>
// kernel: tpu_custom_call.1
$region0: #{tpu_custom_call.1}
  #allocation0 [shape = 'u32[]', space=smem, size = 0x4, offset = 0x4, fixed_abs, tag = 'smem constant byte address 0x4 - core index']
  #allocation1 [shape = 'u32[144,128]{1,0:T(1,128)}', space=vmem, size = 0x12000, scoped, tag = 'internal scratch']
  %s0 = inlined_call_operand.hbm [shape: f32[8,256], index: 0, kind: input, shape index: {}]
  %s1 = inlined_call_operand.hbm [shape: f32[8,256], index: 1, kind: output, shape index: {}]
  %s2 = sld [smem:[#allocation0]]
  $region18: #{tpu_custom_call.1} parent=0
    _
  %s4 = ssub.s32 1, %s2
  %s5 = scalar_select 0, %s4, %s2
  $region1: #{tpu_custom_call.1} parent=0
    #allocation2 [shape = 'u8[8192]{0}', space=vmem, size = 0x2000, scoped, tag = 'input window, operand 0, single buffered']
    #allocation3 [shape = 's32[1]{0}', space=sflag, size = 0x4, scoped, tag = 'scoped memory for tpu_custom_call.1']
    #allocation4 [shape = 's32[1]{0}', space=sflag, size = 0x4, scoped, tag = 'scoped memory for tpu_custom_call.1']
    #allocation5 [shape = 'u8[8192]{0}', space=vmem, size = 0x2000, scoped, tag = 'output window, operand 0, single buffered']
    %6 = vsyncpa [#allocation3], 0
    %7 = vsyncpa [#allocation4], 0
    // Predicated region
    $region2: #{tpu_custom_call.1} parent=1 // pred_check
      _
    $region3: #{tpu_custom_call.1} parent=1 // pred_check_branch
      %9 = sbr.rel (0) target = $region5
    $region4: #{tpu_custom_call.1} parent=1 // pred_region
      %s11 = ssub.s32 256, 256
      %12 = vsyncadd [#allocation3], %s11
      %s14 = sshll.u32 [#allocation2], 4
      %s15 = int_to_ptr.vmem [resolvable:$true] %s14
      %17 = dma.hbm_to_vmem [thread:$0]  %s0, 256, %s15, [#allocation3]
    $region5: #{tpu_custom_call.1} parent=1 // pred_fallthru
      _
    // Predicated region
    $region6: #{tpu_custom_call.1} parent=1 // pred_check
      _
    $region7: #{tpu_custom_call.1} parent=1 // pred_check_branch
      %19 = sbr.rel (0) target = $region9
    $region8: #{tpu_custom_call.1} parent=1 // pred_region
      %20 = dma.done [#allocation3], 256
    $region9: #{tpu_custom_call.1} parent=1 // pred_fallthru
      _
    %v21 = vld [vmem:[#allocation2] sm:$0xff]
    %v22 = vld [vmem:[#allocation2 + $0x8] sm:$0xff]
    %23 = vst [vmem:[#allocation5] sm:$0xff] %v21
    %24 = vst [vmem:[#allocation5 + $0x8] sm:$0xff] %v22
    // Predicated region
    $region10: #{tpu_custom_call.1} parent=1 // pred_check
      _
    $region11: #{tpu_custom_call.1} parent=1 // pred_check_branch
      %26 = sbr.rel (0) target = $region13
    $region12: #{tpu_custom_call.1} parent=1 // pred_region
      %s28 = ssub.s32 256, 256
      %29 = vsyncadd [#allocation4], %s28
      %s31 = sshll.u32 [#allocation5], 4
      %s32 = int_to_ptr.vmem [resolvable:$true] %s31
      %34 = dma.vmem_to_hbm [thread:$0]  %s32, 256, %s1, [#allocation4]
    $region13: #{tpu_custom_call.1} parent=1 // pred_fallthru
      _
    // Predicated region
    $region14: #{tpu_custom_call.1} parent=1 // pred_check
      _
    $region15: #{tpu_custom_call.1} parent=1 // pred_check_branch
      %36 = sbr.rel (0) target = $region17
    $region16: #{tpu_custom_call.1} parent=1 // pred_region
      %37 = dma.done [#allocation4], 256
    $region17: #{tpu_custom_call.1} parent=1 // pred_fallthru
      _
    %38 = vsyncpa [#allocation3], 1
    %39 = vsyncpa [#allocation4], 1

</llo_original>
